<compile_context>
chip_gen: v5e
topology: v5e:2x2
jax: 0.10.0
libtpu: 0.0.40
codegen_flags: <defaults>
</compile_context>

<pallas_src>
import numpy as np

import jax
import jax.numpy as jnp
from jax import lax
from jax.experimental import pallas as pl
from jax.experimental.pallas import tpu as pltpu


def _round_up(n, m):
    return ((n + m - 1) // m) * m


def ann_kernel(x_ref, w1_ref, b1_ref, w2_ref, b2_ref, w3_ref, b3_ref, o_ref):
    # Layouts (TB = batch tile, batch on lanes for all activations):
    #   x  : (TB, in)  natural layout, f32 straight from HBM
    #   w1 : (64, in)   b1 : (64, 1)
    #   w2 : (32, 64)   b2 : (32, 1)
    #   w3 : (1, 32)    b3 : (1, 1)
    #   h1 : (64, TB)   h2 : (32, TB)   out : (1, TB)  (unmasked lane-dense store)
    dot_dtype = w1_ref.dtype                      # bf16 (default) or f32 MXU operands
    x = x_ref[...].astype(dot_dtype)              # cast in VMEM on the VPU

    # Contract on x's last axis: (64, in) x (TB, in)^T -> (64, TB); the small
    # operand transpose is handled by Mosaic (XLU has slack in this kernel).
    dn = (((1,), (1,)), ((), ()))
    h1 = lax.dot_general(w1_ref[...], x, dn, preferred_element_type=jnp.float32)
    h1 = jnp.maximum(h1 + b1_ref[...], 0.0)       # f32 bias + ReLU

    h2 = jnp.dot(w2_ref[...], h1.astype(dot_dtype),
                 preferred_element_type=jnp.float32)
    h2 = jnp.maximum(h2 + b2_ref[...], 0.0)

    # TODO(synk): if the bundle confirms MXU-push-cadence bound, fold biases
    # into the matmuls (ones-augmented K) and compute this (1,32)@(32,TB) layer
    # on VPU+XLU (broadcast-mul + sublane reduce) to drop one push per column.
    out = jnp.dot(w3_ref[...], h2.astype(dot_dtype),
                  preferred_element_type=jnp.float32)
    o_ref[...] = (out + b3_ref[...]).astype(o_ref.dtype)


def ann_forward(x, params, *, block_batch=16384, min_grid_steps=8,
                compute_dtype=jnp.bfloat16):
    """Fused MLP forward. x: (batch, in_features) f32 -> (batch, 1) f32."""
    w1, b1, w2, b2, w3, b3 = params          # stored (fan_in, fan_out) / (1, fan_out)
    batch, in_features = x.shape

    # Batch tile: lane-width multiple, sized so the grid has ~min_grid_steps
    # steps (>=2 keeps both v7x TensorCores busy), capped by block_batch.
    block_batch = max(128, _round_up(block_batch, 128))
    tb = min(block_batch, _round_up(pl.cdiv(batch, min_grid_steps), 128))
    tb = max(tb, 128)
    grid = (pl.cdiv(batch, tb),)             # ragged edge block handled by Pallas

    # Weights -> (out, in) for the batch-on-lanes layout; biases as f32 columns.
    w1t = w1.T.astype(compute_dtype)         # (64, in)
    w2t = w2.T.astype(compute_dtype)         # (32, 64)
    w3t = w3.T.astype(compute_dtype)         # (1, 32)
    b1t = b1.T.astype(jnp.float32)           # (64, 1)
    b2t = b2.T.astype(jnp.float32)           # (32, 1)
    b3t = b3.T.astype(jnp.float32)           # (1, 1)

    # Constant block index -> weights/biases stay VMEM-resident across steps.
    # TODO(synk): pipeline_mode=pl.Buffered(1) on these constants / b3 in SMEM
    # would shave a little VMEM; skipped as a micro-opt.
    const = lambda a: pl.BlockSpec(a.shape, lambda i: (0, 0))

    # Explicit VMEM budget: the (tb, in) input block is lane-padded to 128 and
    # the (1, tb) output block is sublane-padded to 8; add headroom for the
    # f32/bf16 activation temporaries (h1/h2/casts ~ 1 KiB per batch column).
    x_itemsize = x.dtype.itemsize
    x_buf = 2 * tb * _round_up(in_features, 128) * x_itemsize   # dbl-buffered input
    o_buf = 2 * 8 * tb * 4                                      # dbl-buffered output
    temps = tb * 1024
    vmem_limit = int(min(96 << 20, max(32 << 20, x_buf + o_buf + temps + (8 << 20))))

    w_itemsize = np.dtype(compute_dtype).itemsize
    flops = 2 * batch * (in_features * 64 + 64 * 32 + 32 * 1)
    bytes_accessed = int(batch * (in_features * x_itemsize + 4)
                         + (in_features * 64 + 64 * 32 + 32) * w_itemsize
                         + (64 + 32 + 1) * 4)

    outT = pl.pallas_call(
        ann_kernel,
        out_shape=jax.ShapeDtypeStruct((1, batch), jnp.float32),
        grid=grid,
        in_specs=[
            pl.BlockSpec((tb, in_features), lambda i: (i, 0)),   # x tile (natural)
            const(w1t), const(b1t),
            const(w2t), const(b2t),
            const(w3t), const(b3t),
        ],
        out_specs=pl.BlockSpec((1, tb), lambda i: (0, i)),
        compiler_params=pltpu.CompilerParams(
            dimension_semantics=("parallel",),
            vmem_limit_bytes=vmem_limit),
        cost_estimate=pl.CostEstimate(flops=flops, transcendentals=0,
                                      bytes_accessed=bytes_accessed),
    )(x, w1t, b1t, w2t, b2t, w3t, b3t)

    return outT.T                              # (batch, 1), effectively a reshape


def init_params(key, input_size):
    # Deterministic init mimicking PyTorch nn.Linear default:
    # U(-1/sqrt(fan_in), 1/sqrt(fan_in)) for both weight and bias.
    def linear(key, fan_in, fan_out):
        kw, kb = jax.random.split(key)
        bound = 1.0 / jnp.sqrt(jnp.float32(fan_in))
        w = jax.random.uniform(kw, (fan_in, fan_out), jnp.float32, -bound, bound)
        b = jax.random.uniform(kb, (1, fan_out), jnp.float32, -bound, bound)
        return w, b

    k1, k2, k3 = jax.random.split(key, 3)
    w1, b1 = linear(k1, input_size, 64)
    w2, b2 = linear(k2, 64, 32)
    w3, b3 = linear(k3, 32, 1)
    return (w1, b1, w2, b2, w3, b3)


def ann_reference(x, params):
    # Pure-JAX reference for sanity checking.
    w1, b1, w2, b2, w3, b3 = params
    h1 = jnp.maximum(x @ w1 + b1, 0.0)
    h2 = jnp.maximum(h1 @ w2 + b2, 0.0)
    return h2 @ w3 + b3


if __name__ == "__main__":
    key = jax.random.PRNGKey(0)
    k_params, k1, k2, k3 = jax.random.split(key, 4)

    input_size = 8  # X_train.shape[1] in the original script (tabular features)
    params = init_params(k_params, input_size)

    # 1) Tiny batch, f32 MXU operands: exact match against the JAX reference.
    x_small = jax.random.normal(k1, (8, input_size), jnp.float32)
    out_small = jax.block_until_ready(
        ann_forward(x_small, params, compute_dtype=jnp.float32))
    ref_small = ann_reference(x_small, params)
    assert out_small.shape == (8, 1)
    assert jnp.allclose(out_small, ref_small, atol=1e-5, rtol=1e-5)

    # 2) Ragged batch (not a multiple of 128): exercises Pallas edge-block
    #    padding + a 3-step parallel grid, default bf16 MXU operands.
    x_mid = jax.random.normal(k2, (300, input_size), jnp.float32)
    out_mid = jax.block_until_ready(ann_forward(x_mid, params))
    ref_mid = ann_reference(x_mid, params)
    assert out_mid.shape == (300, 1)
    assert jnp.allclose(out_mid, ref_mid, atol=5e-2, rtol=5e-2)

    # 3) Larger batch hitting a multi-128 tile (tb=512, 8 grid steps).
    x_big = jax.random.normal(k3, (4096, input_size), jnp.float32)
    out_big = jax.block_until_ready(ann_forward(x_big, params))
    ref_big = ann_reference(x_big, params)
    assert out_big.shape == (4096, 1)
    assert jnp.allclose(out_big, ref_big, atol=5e-2, rtol=5e-2)

    print("KERNEL_OK")
</pallas_src>

<mosaic_0001>
module attributes {stable_mosaic.version = 11 : i64} {
  func.func @ann_kernel(%arg0: i32, %arg1: memref<128x8xf32, #tpu.memory_space<vmem>>, %arg2: memref<64x8xf32, #tpu.memory_space<vmem>>, %arg3: memref<64x1xf32, #tpu.memory_space<vmem>>, %arg4: memref<32x64xf32, #tpu.memory_space<vmem>>, %arg5: memref<32x1xf32, #tpu.memory_space<vmem>>, %arg6: memref<1x32xf32, #tpu.memory_space<vmem>>, %arg7: memref<1x1xf32, #tpu.memory_space<vmem>>, %arg8: memref<1x128xf32, #tpu.memory_space<vmem>>) attributes {dimension_semantics = [#tpu.dimension_semantics<parallel>], iteration_bounds = array<i64: 1>, scalar_prefetch = 0 : i64, scratch_operands = 0 : i64, tpu.core_type = #tpu.core_type<tc>, window_params = [{transform_indices = @transform_0, window_bounds = array<i64: 128, 8>}, {pipeline_mode = #tpu.pipeline_mode<synchronous>, transform_indices = @transform_1, window_bounds = array<i64: 64, 8>}, {pipeline_mode = #tpu.pipeline_mode<synchronous>, transform_indices = @transform_2, window_bounds = array<i64: 64, 1>}, {pipeline_mode = #tpu.pipeline_mode<synchronous>, transform_indices = @transform_3, window_bounds = array<i64: 32, 64>}, {pipeline_mode = #tpu.pipeline_mode<synchronous>, transform_indices = @transform_4, window_bounds = array<i64: 32, 1>}, {pipeline_mode = #tpu.pipeline_mode<synchronous>, transform_indices = @transform_5, window_bounds = array<i64: 1, 32>}, {pipeline_mode = #tpu.pipeline_mode<synchronous>, transform_indices = @transform_6, window_bounds = array<i64: 1, 1>}, {transform_indices = @transform_7, window_bounds = array<i64: 1, 128>}]} {
    %c0 = arith.constant 0 : index
    %c0_0 = arith.constant 0 : index
    %0 = vector.load %arg1[%c0, %c0_0] : memref<128x8xf32, #tpu.memory_space<vmem>>, vector<128x8xf32>
    %c0_1 = arith.constant 0 : index
    %c0_2 = arith.constant 0 : index
    %1 = vector.load %arg2[%c0_1, %c0_2] : memref<64x8xf32, #tpu.memory_space<vmem>>, vector<64x8xf32>
    %cst = arith.constant dense<0.000000e+00> : vector<64x128xf32>
    %2 = tpu.matmul %1, %0, %cst {dimension_numbers = #tpu.dot_dimension_numbers<[1], [1], [0], [0], [0, 0, 1, 0], [], []>} : vector<64x8xf32>, vector<128x8xf32>, vector<64x128xf32> -> vector<64x128xf32>
    %c0_3 = arith.constant 0 : index
    %c0_4 = arith.constant 0 : index
    %3 = vector.load %arg3[%c0_3, %c0_4] : memref<64x1xf32, #tpu.memory_space<vmem>>, vector<64x1xf32>
    %4 = vector.broadcast %3 : vector<64x1xf32> to vector<64x128xf32>
    %5 = arith.addf %2, %4 : vector<64x128xf32>
    %cst_5 = arith.constant 0.000000e+00 : f32
    %6 = vector.broadcast %cst_5 : f32 to vector<64x128xf32>
    %7 = arith.maximumf %5, %6 : vector<64x128xf32>
    %c0_6 = arith.constant 0 : index
    %c0_7 = arith.constant 0 : index
    %8 = vector.load %arg4[%c0_6, %c0_7] : memref<32x64xf32, #tpu.memory_space<vmem>>, vector<32x64xf32>
    %cst_8 = arith.constant dense<0.000000e+00> : vector<32x128xf32>
    %9 = tpu.matmul %8, %7, %cst_8 {dimension_numbers = #tpu.dot_dimension_numbers<[1], [0], [0], [1], [0, 0, 1, 1], [], []>} : vector<32x64xf32>, vector<64x128xf32>, vector<32x128xf32> -> vector<32x128xf32>
    %c0_9 = arith.constant 0 : index
    %c0_10 = arith.constant 0 : index
    %10 = vector.load %arg5[%c0_9, %c0_10] : memref<32x1xf32, #tpu.memory_space<vmem>>, vector<32x1xf32>
    %11 = vector.broadcast %10 : vector<32x1xf32> to vector<32x128xf32>
    %12 = arith.addf %9, %11 : vector<32x128xf32>
    %cst_11 = arith.constant 0.000000e+00 : f32
    %13 = vector.broadcast %cst_11 : f32 to vector<32x128xf32>
    %14 = arith.maximumf %12, %13 : vector<32x128xf32>
    %c0_12 = arith.constant 0 : index
    %c0_13 = arith.constant 0 : index
    %15 = vector.load %arg6[%c0_12, %c0_13] : memref<1x32xf32, #tpu.memory_space<vmem>>, vector<1x32xf32>
    %cst_14 = arith.constant dense<0.000000e+00> : vector<1x128xf32>
    %16 = tpu.matmul %15, %14, %cst_14 {dimension_numbers = #tpu.dot_dimension_numbers<[1], [0], [0], [1], [0, 0, 1, 1], [], []>} : vector<1x32xf32>, vector<32x128xf32>, vector<1x128xf32> -> vector<1x128xf32>
    %c0_15 = arith.constant 0 : index
    %c0_16 = arith.constant 0 : index
    %17 = vector.load %arg7[%c0_15, %c0_16] : memref<1x1xf32, #tpu.memory_space<vmem>>, vector<1x1xf32>
    %18 = vector.broadcast %17 : vector<1x1xf32> to vector<1x128xf32>
    %19 = arith.addf %16, %18 : vector<1x128xf32>
    %c0_17 = arith.constant 0 : index
    %c0_18 = arith.constant 0 : index
    %20 = vector.load %arg8[%c0_17, %c0_18] : memref<1x128xf32, #tpu.memory_space<vmem>>, vector<1x128xf32>
    tpu.vector_store %arg8[%c0_17, %c0_18], %19 {strides = array<i32>} : memref<1x128xf32, #tpu.memory_space<vmem>>, vector<1x128xf32>,
    return
  }
  func.func @transform_0(%arg0: i32) -> (i32, i32) {
    %c0_i32 = arith.constant 0 : i32
    %c0_i32_0 = arith.constant 0 : i32
    return %arg0, %c0_i32 : i32, i32
  }
  func.func @transform_1(%arg0: i32) -> (i32, i32) {
    %c0_i32 = arith.constant 0 : i32
    %c0_i32_0 = arith.constant 0 : i32
    %c0_i32_1 = arith.constant 0 : i32
    return %c0_i32, %c0_i32_0 : i32, i32
  }
  func.func @transform_2(%arg0: i32) -> (i32, i32) {
    %c0_i32 = arith.constant 0 : i32
    %c0_i32_0 = arith.constant 0 : i32
    %c0_i32_1 = arith.constant 0 : i32
    return %c0_i32, %c0_i32_0 : i32, i32
  }
  func.func @transform_3(%arg0: i32) -> (i32, i32) {
    %c0_i32 = arith.constant 0 : i32
    %c0_i32_0 = arith.constant 0 : i32
    %c0_i32_1 = arith.constant 0 : i32
    return %c0_i32, %c0_i32_0 : i32, i32
  }
  func.func @transform_4(%arg0: i32) -> (i32, i32) {
    %c0_i32 = arith.constant 0 : i32
    %c0_i32_0 = arith.constant 0 : i32
    %c0_i32_1 = arith.constant 0 : i32
    return %c0_i32, %c0_i32_0 : i32, i32
  }
  func.func @transform_5(%arg0: i32) -> (i32, i32) {
    %c0_i32 = arith.constant 0 : i32
    %c0_i32_0 = arith.constant 0 : i32
    %c0_i32_1 = arith.constant 0 : i32
    return %c0_i32, %c0_i32_0 : i32, i32
  }
  func.func @transform_6(%arg0: i32) -> (i32, i32) {
    %c0_i32 = arith.constant 0 : i32
    %c0_i32_0 = arith.constant 0 : i32
    %c0_i32_1 = arith.constant 0 : i32
    return %c0_i32, %c0_i32_0 : i32, i32
  }
  func.func @transform_7(%arg0: i32) -> (i32, i32) {
    %c0_i32 = arith.constant 0 : i32
    %c0_i32_0 = arith.constant 0 : i32
    return %c0_i32, %arg0 : i32, i32
  }
}

</mosaic_0001>

<llo_original>
// kernel: tpu_custom_call.1
$region0: #{tpu_custom_call.1}
  #allocation0 [shape = 'u32[]', space=smem, size = 0x4, offset = 0x4, fixed_abs, tag = 'smem constant byte address 0x4 - core index']
  #allocation1 [shape = 'u32[72,128]{1,0:T(1,128)}', space=vmem, size = 0x9000, scoped, tag = 'internal scratch']
  #allocation2 [shape = 'f32[1,1]{1,0:T(1,128)S(1)}', space=vmem, size = 0x200, scoped, tag = 'scoped memory for tpu_custom_call.1']
  %s0 = inlined_call_operand.vmem [shape: f32[8,8], index: 0, kind: input, shape index: {}]
  %s1 = inlined_call_operand.vmem [shape: f32[64,8], index: 1, kind: input, shape index: {}]
  %s2 = inlined_call_operand.vmem [shape: f32[64,1], index: 2, kind: input, shape index: {}]
  %s3 = inlined_call_operand.vmem [shape: f32[32,64], index: 3, kind: input, shape index: {}]
  %s4 = inlined_call_operand.vmem [shape: f32[32,1], index: 4, kind: input, shape index: {}]
  %s5 = inlined_call_operand.vmem [shape: f32[1,32], index: 5, kind: input, shape index: {}]
  %s6 = inlined_call_operand.<no memory space> [shape: f32[1,1], index: 6, kind: input, shape index: {}]
  %s7 = inlined_call_operand.hbm [shape: f32[1,8], index: 7, kind: output, shape index: {}]
  %s8 = sld [smem:[#allocation0]]
  $region38: #{tpu_custom_call.1} parent=0
    _
  %s10 = ssub.s32 1, %s8
  %s11 = scalar_select 0, %s10, %s8
  %v12 = vstv %s6
  %13 = vst [vmem:[#allocation2] sm:$0x1] %v12
  $region1: #{tpu_custom_call.1} parent=0
    #allocation3 [shape = 'u8[512]{0}', space=vmem, size = 0x400, scoped, tag = 'output window, operand 0, single buffered']
    #allocation4 [shape = 's32[1]{0}', space=sflag, size = 0x4, scoped, tag = 'scoped memory for tpu_custom_call.1']
    %14 = vsyncpa [#allocation4], 0
    // Predicated region
    $region2: #{tpu_custom_call.1} parent=1 // pred_check
      _
    $region3: #{tpu_custom_call.1} parent=1 // pred_check_branch
      %16 = sbr.rel (0) target = $region5
    $region4: #{tpu_custom_call.1} parent=1 // pred_region
      _
    $region5: #{tpu_custom_call.1} parent=1 // pred_fallthru
      _
    // Predicated region
    $region6: #{tpu_custom_call.1} parent=1 // pred_check
      _
    $region7: #{tpu_custom_call.1} parent=1 // pred_check_branch
      %18 = sbr.rel (0) target = $region9
    $region8: #{tpu_custom_call.1} parent=1 // pred_region
      _
    $region9: #{tpu_custom_call.1} parent=1 // pred_fallthru
      _
    // Predicated region
    $region10: #{tpu_custom_call.1} parent=1 // pred_check
      _
    $region11: #{tpu_custom_call.1} parent=1 // pred_check_branch
      %20 = sbr.rel (0) target = $region13
    $region12: #{tpu_custom_call.1} parent=1 // pred_region
      _
    $region13: #{tpu_custom_call.1} parent=1 // pred_fallthru
      _
    // Predicated region
    $region14: #{tpu_custom_call.1} parent=1 // pred_check
      _
    $region15: #{tpu_custom_call.1} parent=1 // pred_check_branch
      %22 = sbr.rel (0) target = $region17
    $region16: #{tpu_custom_call.1} parent=1 // pred_region
      _
    $region17: #{tpu_custom_call.1} parent=1 // pred_fallthru
      _
    // Predicated region
    $region18: #{tpu_custom_call.1} parent=1 // pred_check
      _
    $region19: #{tpu_custom_call.1} parent=1 // pred_check_branch
      %24 = sbr.rel (0) target = $region21
    $region20: #{tpu_custom_call.1} parent=1 // pred_region
      _
    $region21: #{tpu_custom_call.1} parent=1 // pred_fallthru
      _
    // Predicated region
    $region22: #{tpu_custom_call.1} parent=1 // pred_check
      _
    $region23: #{tpu_custom_call.1} parent=1 // pred_check_branch
      %26 = sbr.rel (0) target = $region25
    $region24: #{tpu_custom_call.1} parent=1 // pred_region
      _
    $region25: #{tpu_custom_call.1} parent=1 // pred_fallthru
      _
    // Predicated region
    $region26: #{tpu_custom_call.1} parent=1 // pred_check
      _
    $region27: #{tpu_custom_call.1} parent=1 // pred_check_branch
      %28 = sbr.rel (0) target = $region29
    $region28: #{tpu_custom_call.1} parent=1 // pred_region
      _
    $region29: #{tpu_custom_call.1} parent=1 // pred_fallthru
      _
    %v29 = vld [vmem:[%s0] sm:$0xff]
    %v30 = vld [vmem:[%s0 + $0x8] sm:$0xff]
    %v31 = vld [vmem:[%s0 + $0x10] sm:$0xff]
    %v32 = vld [vmem:[%s0 + $0x18] sm:$0xff]
    %v33 = vld [vmem:[%s0 + $0x20] sm:$0xff]
    %v34 = vld [vmem:[%s0 + $0x28] sm:$0xff]
    %v35 = vld [vmem:[%s0 + $0x30] sm:$0xff]
    %v36 = vld [vmem:[%s0 + $0x38] sm:$0xff]
    %v37 = vld [vmem:[%s0 + $0x40] sm:$0xff]
    %v38 = vld [vmem:[%s0 + $0x48] sm:$0xff]
    %v39 = vld [vmem:[%s0 + $0x50] sm:$0xff]
    %v40 = vld [vmem:[%s0 + $0x58] sm:$0xff]
    %v41 = vld [vmem:[%s0 + $0x60] sm:$0xff]
    %v42 = vld [vmem:[%s0 + $0x68] sm:$0xff]
    %v43 = vld [vmem:[%s0 + $0x70] sm:$0xff]
    %v44 = vld [vmem:[%s0 + $0x78] sm:$0xff]
    %v45 = vld [vmem:[%s1] sm:$0xff]
    %v46 = vld [vmem:[%s1 + $0x8] sm:$0xff]
    %v47 = vld [vmem:[%s1 + $0x10] sm:$0xff]
    %v48 = vld [vmem:[%s1 + $0x18] sm:$0xff]
    %v49 = vld [vmem:[%s1 + $0x20] sm:$0xff]
    %v50 = vld [vmem:[%s1 + $0x28] sm:$0xff]
    %v51 = vld [vmem:[%s1 + $0x30] sm:$0xff]
    %v52 = vld [vmem:[%s1 + $0x38] sm:$0xff]
    %v53 = vld [vmem:[%s2] sm:$0xff]
    %v54 = vld [vmem:[%s2 + $0x8] sm:$0xff]
    %v55 = vld [vmem:[%s2 + $0x10] sm:$0xff]
    %v56 = vld [vmem:[%s2 + $0x18] sm:$0xff]
    %v57 = vld [vmem:[%s2 + $0x20] sm:$0xff]
    %v58 = vld [vmem:[%s2 + $0x28] sm:$0xff]
    %v59 = vld [vmem:[%s2 + $0x30] sm:$0xff]
    %v60 = vld [vmem:[%s2 + $0x38] sm:$0xff]
    %62 = vset.pattern.permute.xlu0 0
    %63 = vperm.xlu0 %62, %v53
    %v64 = vpop.permute.xlu0 %63
    %67 = vset.pattern.permute.xlu0 0
    %68 = vperm.xlu0 %67, %v54
    %v69 = vpop.permute.xlu0 %68
    %72 = vset.pattern.permute.xlu0 0
    %73 = vperm.xlu0 %72, %v55
    %v74 = vpop.permute.xlu0 %73
    %77 = vset.pattern.permute.xlu0 0
    %78 = vperm.xlu0 %77, %v56
    %v79 = vpop.permute.xlu0 %78
    %82 = vset.pattern.permute.xlu0 0
    %83 = vperm.xlu0 %82, %v57
    %v84 = vpop.permute.xlu0 %83
    %87 = vset.pattern.permute.xlu0 0
    %88 = vperm.xlu0 %87, %v58
    %v89 = vpop.permute.xlu0 %88
    %92 = vset.pattern.permute.xlu0 0
    %93 = vperm.xlu0 %92, %v59
    %v94 = vpop.permute.xlu0 %93
    %97 = vset.pattern.permute.xlu0 0
    %98 = vperm.xlu0 %97, %v60
    %v99 = vpop.permute.xlu0 %98
    %vm101 = vcmask 64512
    %v103 = vsel %vm101, %v45, 0
    %v106 = vsel %vm101, %v46, 0
    %v109 = vsel %vm101, %v47, 0
    %v112 = vsel %vm101, %v48, 0
    %v115 = vsel %vm101, %v49, 0
    %v118 = vsel %vm101, %v50, 0
    %v121 = vsel %vm101, %v51, 0
    %v124 = vsel %vm101, %v52, 0
    %v127 = vsel %vm101, %v29, 0
    %v130 = vsel %vm101, %v30, 0
    %v133 = vsel %vm101, %v31, 0
    %v136 = vsel %vm101, %v32, 0
    %v139 = vsel %vm101, %v33, 0
    %v142 = vsel %vm101, %v34, 0
    %v145 = vsel %vm101, %v35, 0
    %v148 = vsel %vm101, %v36, 0
    %v151 = vsel %vm101, %v37, 0
    %v154 = vsel %vm101, %v38, 0
    %v157 = vsel %vm101, %v39, 0
    %v160 = vsel %vm101, %v40, 0
    %v163 = vsel %vm101, %v41, 0
    %v166 = vsel %vm101, %v42, 0
    %v169 = vsel %vm101, %v43, 0
    %v172 = vsel %vm101, %v44, 0
    %174 = vmatpush.xpose.msra.mxu0 %v172
    %175 = vmatpush.xpose.msra.mxu0 %v169
    %176 = vmatpush.xpose.msra.mxu0 %v166
    %177 = vmatpush.xpose.msra.mxu0 %v163
    %178 = vmatpush.xpose.msra.mxu0 %v160
    %179 = vmatpush.xpose.msra.mxu0 %v157
    %180 = vmatpush.xpose.msra.mxu0 %v154
    %181 = vmatpush.xpose.msra.mxu0 %v151
    %182 = vmatpush.xpose.msra.mxu0 %v148
    %183 = vmatpush.xpose.msra.mxu0 %v145
    %184 = vmatpush.xpose.msra.mxu0 %v142
    %185 = vmatpush.xpose.msra.mxu0 %v139
    %186 = vmatpush.xpose.msra.mxu0 %v136
    %187 = vmatpush.xpose.msra.mxu0 %v133
    %188 = vmatpush.xpose.msra.mxu0 %v130
    %189 = vmatpush.xpose.msra.mxu0 %v127
    %190 = vmatmul.f32.gmra.mxu0 %v103
    %v191 = vpop.f32.mrf.mxu0
    %v192 = vadd.f32 %v64, %v191
    %193 = vmatmul.f32.gmra.mxu0 %v106
    %v194 = vpop.f32.mrf.mxu0
    %v195 = vadd.f32 %v69, %v194
    %196 = vmatmul.f32.gmra.mxu0 %v109
    %v197 = vpop.f32.mrf.mxu0
    %v198 = vadd.f32 %v74, %v197
    %199 = vmatmul.f32.gmra.mxu0 %v112
    %v200 = vpop.f32.mrf.mxu0
    %v201 = vadd.f32 %v79, %v200
    %202 = vmatmul.f32.gmra.mxu0 %v115
    %v203 = vpop.f32.mrf.mxu0
    %v204 = vadd.f32 %v84, %v203
    %205 = vmatmul.f32.gmra.mxu0 %v118
    %v206 = vpop.f32.mrf.mxu0
    %v207 = vadd.f32 %v89, %v206
    %208 = vmatmul.f32.gmra.mxu0 %v121
    %v209 = vpop.f32.mrf.mxu0
    %v210 = vadd.f32 %v94, %v209
    %211 = vmatmul.f32.gmra.mxu0 %v124
    %v212 = vpop.f32.mrf.mxu0
    %v213 = vadd.f32 %v99, %v212
    %214 = vdwg.mxu0
    %v215 = vmax.f32 %v192, 0.0
    %v216 = vmax.f32 %v195, 0.0
    %v217 = vmax.f32 %v198, 0.0
    %v218 = vmax.f32 %v201, 0.0
    %v219 = vmax.f32 %v204, 0.0
    %v220 = vmax.f32 %v207, 0.0
    %v221 = vmax.f32 %v210, 0.0
    %v222 = vmax.f32 %v213, 0.0
    %v223 = vld [vmem:[%s3] sm:$0xff]
    %v224 = vld [vmem:[%s3 + $0x8] sm:$0xff]
    %v225 = vld [vmem:[%s3 + $0x10] sm:$0xff]
    %v226 = vld [vmem:[%s3 + $0x18] sm:$0xff]
    %v227 = vld [vmem:[%s4] sm:$0xff]
    %v228 = vld [vmem:[%s4 + $0x8] sm:$0xff]
    %v229 = vld [vmem:[%s4 + $0x10] sm:$0xff]
    %v230 = vld [vmem:[%s4 + $0x18] sm:$0xff]
    %232 = vset.pattern.permute.xlu0 0
    %233 = vperm.xlu0 %232, %v227
    %v234 = vpop.permute.xlu0 %233
    %237 = vset.pattern.permute.xlu0 0
    %238 = vperm.xlu0 %237, %v228
    %v239 = vpop.permute.xlu0 %238
    %242 = vset.pattern.permute.xlu0 0
    %243 = vperm.xlu0 %242, %v229
    %v244 = vpop.permute.xlu0 %243
    %247 = vset.pattern.permute.xlu0 0
    %248 = vperm.xlu0 %247, %v230
    %v249 = vpop.permute.xlu0 %248
    %vm251 = vcmask 523264
    %v253 = vsel %vm251, %v223, 0
    %v256 = vsel %vm251, %v224, 0
    %v259 = vsel %vm251, %v225, 0
    %v262 = vsel %vm251, %v226, 0
    %264 = vmatpush.msra.mxu0 0.0
    %265 = vmatpush.msra.mxu0 0.0
    %266 = vmatpush.msra.mxu0 0.0
    %267 = vmatpush.msra.mxu0 0.0
    %268 = vmatpush.msra.mxu0 0.0
    %269 = vmatpush.msra.mxu0 0.0
    %270 = vmatpush.msra.mxu0 0.0
    %271 = vmatpush.msra.mxu0 0.0
    %272 = vmatpush.msra.mxu0 %v222
    %273 = vmatpush.msra.mxu0 %v221
    %274 = vmatpush.msra.mxu0 %v220
    %275 = vmatpush.msra.mxu0 %v219
    %276 = vmatpush.msra.mxu0 %v218
    %277 = vmatpush.msra.mxu0 %v217
    %278 = vmatpush.msra.mxu0 %v216
    %279 = vmatpush.msra.mxu0 %v215
    %280 = vmatmul.f32.gmra.mxu0 %v253
    %v281 = vpop.f32.mrf.mxu0
    %v282 = vadd.f32 %v234, %v281
    %283 = vmatmul.f32.gmra.mxu0 %v256
    %v284 = vpop.f32.mrf.mxu0
    %v285 = vadd.f32 %v239, %v284
    %286 = vmatmul.f32.gmra.mxu0 %v259
    %v287 = vpop.f32.mrf.mxu0
    %v288 = vadd.f32 %v244, %v287
    %289 = vmatmul.f32.gmra.mxu0 %v262
    %v290 = vpop.f32.mrf.mxu0
    %v291 = vadd.f32 %v249, %v290
    %292 = vdwg.mxu0
    %v293 = vmax.f32 %v282, 0.0
    %v294 = vmax.f32 %v285, 0.0
    %v295 = vmax.f32 %v288, 0.0
    %v296 = vmax.f32 %v291, 0.0
    %v297 = vld [vmem:[%s5] sm:$0x1]
    %v298 = vld [vmem:[#allocation2] sm:$0x1]
    %300 = vset.pattern.permute.xlu0 0
    %301 = vperm.xlu0 %300, %v298
    %v302 = vpop.permute.xlu0 %301
    %v304 = vperm.slane %v302, 0
    %vm305 = vcmask 261120
    %v307 = vsel %vm305, %v297, 0
    %309 = vmatpush.msra.mxu0 0.0
    %310 = vmatpush.msra.mxu0 0.0
    %311 = vmatpush.msra.mxu0 0.0
    %312 = vmatpush.msra.mxu0 0.0
    %313 = vmatpush.msra.mxu0 0.0
    %314 = vmatpush.msra.mxu0 0.0
    %315 = vmatpush.msra.mxu0 0.0
    %316 = vmatpush.msra.mxu0 0.0
    %317 = vmatpush.msra.mxu0 0.0
    %318 = vmatpush.msra.mxu0 0.0
    %319 = vmatpush.msra.mxu0 0.0
    %320 = vmatpush.msra.mxu0 0.0
    %321 = vmatpush.msra.mxu0 %v296
    %322 = vmatpush.msra.mxu0 %v295
    %323 = vmatpush.msra.mxu0 %v294
    %324 = vmatpush.msra.mxu0 %v293
    %325 = vmatmul.f32.gmra.mxu0 %v307
    %v326 = vpop.f32.mrf.mxu0
    %v327 = vadd.f32 %v304, %v326
    %328 = vdwg.mxu0
    %329 = vst [vmem:[#allocation3] sm:$0x1] %v327
    // Predicated region
    $region30: #{tpu_custom_call.1} parent=1 // pred_check
      _
    $region31: #{tpu_custom_call.1} parent=1 // pred_check_branch
      %331 = sbr.rel (0) target = $region33
    $region32: #{tpu_custom_call.1} parent=1 // pred_region
      %333 = vsyncadd [#allocation4], 0
      %s335 = sshll.u32 [#allocation3], 4
      %s336 = int_to_ptr.vmem [resolvable:$true] %s335
      %s337 = sshll.u32 %s7, 4
      %s338 = int_to_ptr.hbm [resolvable:$true] %s337
      %340 = dma.vmem_to_hbm [thread:$0]  %s336, 16, %s338, [#allocation4]
    $region33: #{tpu_custom_call.1} parent=1 // pred_fallthru
      _
    // Predicated region
    $region34: #{tpu_custom_call.1} parent=1 // pred_check
      _
    $region35: #{tpu_custom_call.1} parent=1 // pred_check_branch
      %342 = sbr.rel (0) target = $region37
    $region36: #{tpu_custom_call.1} parent=1 // pred_region
      %344 = dma.done [#allocation4], 16
    $region37: #{tpu_custom_call.1} parent=1 // pred_fallthru
      _
    %345 = vsyncpa [#allocation4], 1

</llo_original>
